<compile_context>
chip_gen: v7x
topology: tpu7x:2x2x1
jax: 0.10.0
libtpu: 0.0.40
codegen_flags: <defaults>
</compile_context>

<pallas_src>
import jax
import jax.numpy as jnp
from jax.experimental import pallas as pl
from jax.experimental.pallas import tpu as pltpu


# ----------------------------------------------------------------------------
# Pallas kernel: fused  [q_linear ; k_linear] -> QK^T -> scale -> softmax
#                -> dropout -> @ V   for a block of Bblk batch elements.
# ----------------------------------------------------------------------------
def _attn_kernel(scale_ref, thr_ref, inv_ref,        # SMEM scalars (1,)
                 q_ref, k_ref, v_ref, bits_ref,      # (Bblk,S,*) VMEM blocks
                 w_ref, b_ref,                       # fused (Din,2Dq) / (1,2Dq)
                 o_ref):                             # (Bblk,S,Dv)
    bblk, S, din = q_ref.shape
    rows = bblk * S
    dq = b_ref.shape[-1] // 2

    # Fused Q/K projection: stack query & key rows -> a single MXU matmul
    # against the concatenated [Wq^T | Wk^T] weight, then slice the two blocks.
    x = jnp.concatenate([q_ref[...].reshape(rows, din),
                         k_ref[...].reshape(rows, din)], axis=0)       # (2*rows, Din)
    proj = jnp.dot(x, w_ref[...], preferred_element_type=jnp.float32) + b_ref[...]
    q = proj[:rows, :dq].reshape(bblk, S, dq)
    k = proj[rows:, dq:].reshape(bblk, S, dq)

    # Scaled scores: contraction on the last dim of both operands
    # (no explicit k transpose through the XLU).
    s = jnp.einsum('bqd,bkd->bqk', q, k,
                   preferred_element_type=jnp.float32) * scale_ref[0]

    # Numerically stable softmax; denominator reciprocal on the EUP slot.
    m = jnp.max(s, axis=-1, keepdims=True)
    e = jnp.exp(s - m)
    probs = e * pl.reciprocal(jnp.sum(e, axis=-1, keepdims=True), approx=True)

    # Dropout in the integer domain: keep iff bits >= threshold (P = 1 - p),
    # kept elements scaled once by 1/(1-p); p==1 handled via inv_keep == 0.
    keep = bits_ref[...] >= thr_ref[0]
    probs = jnp.where(keep, probs * inv_ref[0], 0.0)

    # Attention-weighted values (batched MXU matmul).
    out = jnp.einsum('bqk,bkd->bqd', probs, v_ref[...],
                     preferred_element_type=jnp.float32)
    o_ref[...] = out.astype(o_ref.dtype)


def _pick_bblk(B, S, max_rows=256):
    """Largest divisor of B with Bblk*S <= max_rows (packs MXU sublanes)."""
    bblk = 1
    for d in range(1, B + 1):
        if B % d == 0 and d * S <= max_rows:
            bblk = d
    return bblk


# ----------------------------------------------------------------------------
# Wrapper: mirrors Model.forward(query, key, value, scale_factor, dropout_p)
# ----------------------------------------------------------------------------
@jax.jit
def model_forward(query, key, value, scale_factor, dropout_p, params, rng_key):
    B, S, Din = query.shape
    Dv = value.shape[-1]
    Dq = params["wq"].shape[0]                      # q_linear out-features (256)

    # Fused projection weight/bias:  [Wq^T | Wk^T]  ->  (Din, 2*Dq)
    w_fused = jnp.concatenate([params["wq"].T, params["wk"].T], axis=1)
    b_fused = jnp.concatenate([params["bq"], params["bk"]]).reshape(1, 2 * Dq)

    # Dropout scalars (inverted-dropout, matches F.dropout(training=True)).
    p = jnp.clip(jnp.asarray(dropout_p, jnp.float32), 0.0, 1.0)
    thr = jnp.where(p >= 1.0,
                    jnp.uint32(0xFFFFFFFF),
                    (p * jnp.float32(4294967296.0)).astype(jnp.uint32))
    inv_keep = jnp.where(p >= 1.0, 0.0, 1.0 / (1.0 - p)).astype(jnp.float32)

    # Random bits generated host-side (TODO(synk): pltpu.prng_* has no CPU
    # interpret lowering, so the raw draw stays in the wrapper).
    bits = jax.random.bits(rng_key, (B, S, S), dtype=jnp.uint32)

    scale_arr = jnp.asarray(scale_factor, jnp.float32).reshape(1)
    thr_arr = thr.reshape(1)
    inv_arr = inv_keep.reshape(1)

    Bblk = _pick_bblk(B, S)
    grid = (B // Bblk,)
    smem = pl.BlockSpec(memory_space=pltpu.SMEM)

    out = pl.pallas_call(
        _attn_kernel,
        grid=grid,
        out_shape=jax.ShapeDtypeStruct((B, S, Dv), jnp.float32),
        in_specs=[
            smem, smem, smem,                                     # scale, thr, inv_keep
            pl.BlockSpec((Bblk, S, Din), lambda b: (b, 0, 0)),    # query
            pl.BlockSpec((Bblk, S, Din), lambda b: (b, 0, 0)),    # key
            pl.BlockSpec((Bblk, S, Dv), lambda b: (b, 0, 0)),     # value
            pl.BlockSpec((Bblk, S, S), lambda b: (b, 0, 0)),      # dropout bits
            pl.BlockSpec((Din, 2 * Dq), lambda b: (0, 0)),        # [Wq^T|Wk^T]
            pl.BlockSpec((1, 2 * Dq), lambda b: (0, 0)),          # [bq|bk]
        ],
        out_specs=pl.BlockSpec((Bblk, S, Dv), lambda b: (b, 0, 0)),
        compiler_params=pltpu.CompilerParams(
            dimension_semantics=("parallel",)),
    )(scale_arr, thr_arr, inv_arr, query, key, value, bits, w_fused, b_fused)
    return out


def _reference(query, key, value, scale_factor, dropout_p, params, rng_key):
    """Pure-JAX reference using the same dropout bits / threshold."""
    q = query @ params["wq"].T + params["bq"]
    k = key @ params["wk"].T + params["bk"]
    s = jnp.einsum('bqd,bkd->bqk', q, k) * scale_factor
    probs = jax.nn.softmax(s, axis=-1)
    B, S = query.shape[0], query.shape[1]
    p = jnp.clip(jnp.float32(dropout_p), 0.0, 1.0)
    bits = jax.random.bits(rng_key, (B, S, S), dtype=jnp.uint32)
    thr = jnp.where(p >= 1.0, jnp.uint32(0xFFFFFFFF),
                    (p * jnp.float32(4294967296.0)).astype(jnp.uint32))
    inv = jnp.where(p >= 1.0, 0.0, 1.0 / (1.0 - p))
    probs = jnp.where(bits >= thr, probs * inv, 0.0)
    return jnp.einsum('bqk,bkd->bqd', probs, value)


def init_params(rng):
    """Deterministic init matching torch.nn.Linear(512, 256) shapes."""
    k1, k2, k3, k4 = jax.random.split(rng, 4)
    bound = 1.0 / jnp.sqrt(512.0)
    return {
        "wq": jax.random.uniform(k1, (256, 512), jnp.float32, -bound, bound),
        "bq": jax.random.uniform(k2, (256,), jnp.float32, -bound, bound),
        "wk": jax.random.uniform(k3, (256, 512), jnp.float32, -bound, bound),
        "bk": jax.random.uniform(k4, (256,), jnp.float32, -bound, bound),
    }


if __name__ == "__main__":
    root = jax.random.PRNGKey(0)
    k_params, k_q, k_k, k_v, k_p, k_bits = jax.random.split(root, 6)

    params = init_params(k_params)

    # Small shapes consistent with the module: Linear expects 512-dim inputs,
    # projections are 256-dim, value matches the (1, 8, 256) global.
    B, S, Din, Dv = 1, 8, 512, 256
    query = jax.random.normal(k_q, (B, S, Din), jnp.float32)
    key = jax.random.normal(k_k, (B, S, Din), jnp.float32)
    value = jax.random.normal(k_v, (B, S, Dv), jnp.float32)

    scale_factor = 1.0
    # mirrors `torch.empty((1,)).uniform_()` but deterministic
    dropout_p = float(jax.random.uniform(k_p, ()))

    out = model_forward(query, key, value, scale_factor, dropout_p, params, k_bits)
    jax.block_until_ready(out)
    assert out.shape == (B, S, Dv)

    ref = _reference(query, key, value, scale_factor, dropout_p, params, k_bits)
    err = float(jnp.max(jnp.abs(out - ref) / (jnp.abs(ref) + 1.0)))
    assert err < 5e-2, f"mismatch vs reference: {err}"
    print("KERNEL_OK")
</pallas_src>

<mosaic_0001>
module attributes {stable_mosaic.version = 11 : i64} {
  func.func @_attn_kernel(%arg0: i32, %arg1: memref<1xf32, #tpu.memory_space<smem>>, %arg2: memref<1xi32, #tpu.memory_space<smem>>, %arg3: memref<1xf32, #tpu.memory_space<smem>>, %arg4: memref<1x8x512xf32, #tpu.memory_space<vmem>>, %arg5: memref<1x8x512xf32, #tpu.memory_space<vmem>>, %arg6: memref<1x8x256xf32, #tpu.memory_space<vmem>>, %arg7: memref<1x8x8xi32, #tpu.memory_space<vmem>>, %arg8: memref<512x512xf32, #tpu.memory_space<vmem>>, %arg9: memref<1x512xf32, #tpu.memory_space<vmem>>, %arg10: memref<1x8x256xf32, #tpu.memory_space<vmem>>) attributes {dimension_semantics = [#tpu.dimension_semantics<parallel>], iteration_bounds = array<i64: 1>, scalar_prefetch = 0 : i64, scratch_operands = 0 : i64, tpu.core_type = #tpu.core_type<tc>, window_params = [{transform_indices = @transform_0, window_bounds = array<i64: 1>}, {transform_indices = @transform_1, window_bounds = array<i64: 1>}, {transform_indices = @transform_2, window_bounds = array<i64: 1>}, {transform_indices = @transform_3, window_bounds = array<i64: 1, 8, 512>}, {transform_indices = @transform_4, window_bounds = array<i64: 1, 8, 512>}, {transform_indices = @transform_5, window_bounds = array<i64: 1, 8, 256>}, {transform_indices = @transform_6, window_bounds = array<i64: 1, 8, 8>}, {pipeline_mode = #tpu.pipeline_mode<synchronous>, transform_indices = @transform_7, window_bounds = array<i64: 512, 512>}, {pipeline_mode = #tpu.pipeline_mode<synchronous>, transform_indices = @transform_8, window_bounds = array<i64: 1, 512>}, {transform_indices = @transform_9, window_bounds = array<i64: 1, 8, 256>}]} {
    %c0 = arith.constant 0 : index
    %c0_0 = arith.constant 0 : index
    %c0_1 = arith.constant 0 : index
    %0 = vector.load %arg4[%c0, %c0_0, %c0_1] : memref<1x8x512xf32, #tpu.memory_space<vmem>>, vector<1x8x512xf32>
    %1 = vector.shape_cast %0 : vector<1x8x512xf32> to vector<8x512xf32>
    %c0_2 = arith.constant 0 : index
    %c0_3 = arith.constant 0 : index
    %c0_4 = arith.constant 0 : index
    %2 = vector.load %arg5[%c0_2, %c0_3, %c0_4] : memref<1x8x512xf32, #tpu.memory_space<vmem>>, vector<1x8x512xf32>
    %3 = vector.shape_cast %2 : vector<1x8x512xf32> to vector<8x512xf32>
    %4 = tpu.concatenate %1, %3 in 0 : vector<8x512xf32>, vector<8x512xf32> -> vector<16x512xf32>
    %c0_5 = arith.constant 0 : index
    %c0_6 = arith.constant 0 : index
    %5 = vector.load %arg8[%c0_5, %c0_6] : memref<512x512xf32, #tpu.memory_space<vmem>>, vector<512x512xf32>
    %cst = arith.constant dense<0.000000e+00> : vector<16x512xf32>
    %6 = tpu.matmul %4, %5, %cst {dimension_numbers = #tpu.dot_dimension_numbers<[1], [0], [0], [1], [0, 0, 1, 1], [], []>} : vector<16x512xf32>, vector<512x512xf32>, vector<16x512xf32> -> vector<16x512xf32>
    %c0_7 = arith.constant 0 : index
    %c0_8 = arith.constant 0 : index
    %7 = vector.load %arg9[%c0_7, %c0_8] : memref<1x512xf32, #tpu.memory_space<vmem>>, vector<1x512xf32>
    %8 = vector.broadcast %7 : vector<1x512xf32> to vector<16x512xf32>
    %9 = arith.addf %6, %8 : vector<16x512xf32>
    %10 = vector.extract_strided_slice %9 {offsets = [0, 0], sizes = [8, 256], strides = [1, 1]} : vector<16x512xf32> to vector<8x256xf32>
    %11 = vector.shape_cast %10 : vector<8x256xf32> to vector<1x8x256xf32>
    %12 = vector.extract_strided_slice %9 {offsets = [8, 256], sizes = [8, 256], strides = [1, 1]} : vector<16x512xf32> to vector<8x256xf32>
    %13 = vector.shape_cast %12 : vector<8x256xf32> to vector<1x8x256xf32>
    "tpu.trace_start"() <{level = 10 : i32, message = "bqd,bkd->bqk"}> : () -> ()
    %cst_9 = arith.constant dense<0.000000e+00> : vector<1x8x8xf32>
    %14 = tpu.matmul %11, %13, %cst_9 {dimension_numbers = #tpu.dot_dimension_numbers<[2], [2], [1], [1], [0, 0, 0, 1, 1, 1], [0], [0]>} : vector<1x8x256xf32>, vector<1x8x256xf32>, vector<1x8x8xf32> -> vector<1x8x8xf32>
    "tpu.trace_stop"() : () -> ()
    %c0_10 = arith.constant 0 : index
    %15 = memref.load %arg1[%c0_10] : memref<1xf32, #tpu.memory_space<smem>>
    %16 = vector.broadcast %15 : f32 to vector<1x8x8xf32>
    %17 = arith.mulf %14, %16 : vector<1x8x8xf32>
    %cst_11 = arith.constant dense<0xFF800000> : vector<1x8xf32>
    %18 = vector.multi_reduction <maximumf>, %17, %cst_11 [2] : vector<1x8x8xf32> to vector<1x8xf32>
    %19 = vector.shape_cast %18 : vector<1x8xf32> to vector<1x8x1xf32>
    %20 = vector.broadcast %19 : vector<1x8x1xf32> to vector<1x8x8xf32>
    %21 = arith.subf %17, %20 : vector<1x8x8xf32>
    %22 = math.exp %21 : vector<1x8x8xf32>
    %cst_12 = arith.constant dense<0.000000e+00> : vector<1x8xf32>
    %23 = vector.multi_reduction <add>, %22, %cst_12 [2] : vector<1x8x8xf32> to vector<1x8xf32>
    %24 = vector.shape_cast %23 : vector<1x8xf32> to vector<1x8x1xf32>
    %25 = tpu.reciprocal %24 {approx = true} : vector<1x8x1xf32> -> vector<1x8x1xf32>
    %26 = vector.broadcast %25 : vector<1x8x1xf32> to vector<1x8x8xf32>
    %27 = arith.mulf %22, %26 : vector<1x8x8xf32>
    %c0_13 = arith.constant 0 : index
    %c0_14 = arith.constant 0 : index
    %c0_15 = arith.constant 0 : index
    %28 = vector.load %arg7[%c0_13, %c0_14, %c0_15] : memref<1x8x8xi32, #tpu.memory_space<vmem>>, vector<1x8x8xi32>
    %c0_16 = arith.constant 0 : index
    %29 = memref.load %arg2[%c0_16] : memref<1xi32, #tpu.memory_space<smem>>
    %30 = vector.broadcast %29 : i32 to vector<1x8x8xi32>
    %31 = arith.cmpi uge, %28, %30 : vector<1x8x8xi32>
    %c0_17 = arith.constant 0 : index
    %32 = memref.load %arg3[%c0_17] : memref<1xf32, #tpu.memory_space<smem>>
    %33 = vector.broadcast %32 : f32 to vector<1x8x8xf32>
    %34 = arith.mulf %27, %33 : vector<1x8x8xf32>
    %cst_18 = arith.constant 0.000000e+00 : f32
    %35 = vector.broadcast %cst_18 : f32 to vector<1x8x8xf32>
    %36 = arith.select %31, %34, %35 : vector<1x8x8xi1>, vector<1x8x8xf32>
    %c0_19 = arith.constant 0 : index
    %c0_20 = arith.constant 0 : index
    %c0_21 = arith.constant 0 : index
    %37 = vector.load %arg6[%c0_19, %c0_20, %c0_21] : memref<1x8x256xf32, #tpu.memory_space<vmem>>, vector<1x8x256xf32>
    "tpu.trace_start"() <{level = 10 : i32, message = "bqk,bkd->bqd"}> : () -> ()
    %cst_22 = arith.constant dense<0.000000e+00> : vector<1x8x256xf32>
    %38 = tpu.matmul %36, %37, %cst_22 {dimension_numbers = #tpu.dot_dimension_numbers<[2], [1], [1], [2], [0, 0, 0, 1, 1, 2], [0], [0]>} : vector<1x8x8xf32>, vector<1x8x256xf32>, vector<1x8x256xf32> -> vector<1x8x256xf32>
    "tpu.trace_stop"() : () -> ()
    %c0_23 = arith.constant 0 : index
    %c0_24 = arith.constant 0 : index
    %c0_25 = arith.constant 0 : index
    %39 = vector.load %arg10[%c0_23, %c0_24, %c0_25] : memref<1x8x256xf32, #tpu.memory_space<vmem>>, vector<1x8x256xf32>
    tpu.vector_store %arg10[%c0_23, %c0_24, %c0_25], %38 {strides = array<i32>} : memref<1x8x256xf32, #tpu.memory_space<vmem>>, vector<1x8x256xf32>,
    return
  }
  func.func @transform_0(%arg0: i32) -> i32 {
    %c0_i32 = arith.constant 0 : i32
    %c0_i32_0 = arith.constant 0 : i32
    return %c0_i32 : i32
  }
  func.func @transform_1(%arg0: i32) -> i32 {
    %c0_i32 = arith.constant 0 : i32
    %c0_i32_0 = arith.constant 0 : i32
    return %c0_i32 : i32
  }
  func.func @transform_2(%arg0: i32) -> i32 {
    %c0_i32 = arith.constant 0 : i32
    %c0_i32_0 = arith.constant 0 : i32
    return %c0_i32 : i32
  }
  func.func @transform_3(%arg0: i32) -> (i32, i32, i32) {
    %c0_i32 = arith.constant 0 : i32
    %c0_i32_0 = arith.constant 0 : i32
    %c0_i32_1 = arith.constant 0 : i32
    return %arg0, %c0_i32, %c0_i32_0 : i32, i32, i32
  }
  func.func @transform_4(%arg0: i32) -> (i32, i32, i32) {
    %c0_i32 = arith.constant 0 : i32
    %c0_i32_0 = arith.constant 0 : i32
    %c0_i32_1 = arith.constant 0 : i32
    return %arg0, %c0_i32, %c0_i32_0 : i32, i32, i32
  }
  func.func @transform_5(%arg0: i32) -> (i32, i32, i32) {
    %c0_i32 = arith.constant 0 : i32
    %c0_i32_0 = arith.constant 0 : i32
    %c0_i32_1 = arith.constant 0 : i32
    return %arg0, %c0_i32, %c0_i32_0 : i32, i32, i32
  }
  func.func @transform_6(%arg0: i32) -> (i32, i32, i32) {
    %c0_i32 = arith.constant 0 : i32
    %c0_i32_0 = arith.constant 0 : i32
    %c0_i32_1 = arith.constant 0 : i32
    return %arg0, %c0_i32, %c0_i32_0 : i32, i32, i32
  }
  func.func @transform_7(%arg0: i32) -> (i32, i32) {
    %c0_i32 = arith.constant 0 : i32
    %c0_i32_0 = arith.constant 0 : i32
    %c0_i32_1 = arith.constant 0 : i32
    return %c0_i32, %c0_i32_0 : i32, i32
  }
  func.func @transform_8(%arg0: i32) -> (i32, i32) {
    %c0_i32 = arith.constant 0 : i32
    %c0_i32_0 = arith.constant 0 : i32
    %c0_i32_1 = arith.constant 0 : i32
    return %c0_i32, %c0_i32_0 : i32, i32
  }
  func.func @transform_9(%arg0: i32) -> (i32, i32, i32) {
    %c0_i32 = arith.constant 0 : i32
    %c0_i32_0 = arith.constant 0 : i32
    %c0_i32_1 = arith.constant 0 : i32
    return %arg0, %c0_i32, %c0_i32_0 : i32, i32, i32
  }
}

</mosaic_0001>

<llo_original>
// kernel: model_forward.1
$region0: #{model_forward.1}
  #allocation0 [shape = 'u32[]', space=smem, size = 0x4, offset = 0x4, fixed_abs, tag = 'smem constant byte address 0x4 - core index']
  #allocation1 [shape = 'u32[144,128]{1,0:T(1,128)}', space=vmem, size = 0x12000, scoped, tag = 'internal scratch']
  #allocation2 [shape = 'f32[1]{0:T(128)S(6)}', space=smem, size = 0x200, scoped, tag = 'scoped memory for model_forward.1']
  #allocation3 [shape = 'u32[1]{0:T(128)S(6)}', space=smem, size = 0x200, scoped, tag = 'scoped memory for model_forward.1']
  #allocation4 [shape = 'f32[1]{0:T(128)S(6)}', space=smem, size = 0x200, scoped, tag = 'scoped memory for model_forward.1']
  %s0 = inlined_call_operand.<no memory space> [shape: f32[1], index: 0, kind: input, shape index: {}]
  %s1 = inlined_call_operand.<no memory space> [shape: u32[1], index: 1, kind: input, shape index: {}]
  %s2 = inlined_call_operand.<no memory space> [shape: f32[1], index: 2, kind: input, shape index: {}]
  %s3 = inlined_call_operand.vmem [shape: f32[1,8,512], index: 3, kind: input, shape index: {}]
  %s4 = inlined_call_operand.vmem [shape: f32[1,8,512], index: 4, kind: input, shape index: {}]
  %s5 = inlined_call_operand.vmem [shape: f32[1,8,256], index: 5, kind: input, shape index: {}]
  %s6 = inlined_call_operand.vmem [shape: u32[1,8,8], index: 6, kind: input, shape index: {}]
  %s7 = inlined_call_operand.vmem [shape: f32[512,512], index: 7, kind: input, shape index: {}]
  %s8 = inlined_call_operand.vmem [shape: f32[1,512], index: 8, kind: input, shape index: {}]
  %s9 = inlined_call_operand.hbm [shape: f32[1,8,256], index: 9, kind: output, shape index: {}]
  %s10 = sld [smem:[#allocation0]]
  $region46: #{model_forward.1} parent=0
    _
  %s12 = ssub.s32 1, %s10
  %s13 = scalar_select 0, %s12, %s10
  %14 = sst [smem:[#allocation2]] %s0
  %15 = sst [smem:[#allocation3]] %s1
  %16 = sst [smem:[#allocation4]] %s2
  $region1: #{model_forward.1} parent=0
    #allocation5 [shape = 'u8[8192]{0}', space=vmem, size = 0x2000, scoped, tag = 'output window, operand 0, single buffered']
    #allocation6 [shape = 's32[1]{0}', space=sflag, size = 0x4, scoped, tag = 'scoped memory for model_forward.1']
    %17 = vsyncpa [#allocation6], 0
    // Predicated region
    $region2: #{model_forward.1} parent=1 // pred_check
      _
    $region3: #{model_forward.1} parent=1 // pred_check_branch
      %19 = sbr.rel (0) target = $region5
    $region4: #{model_forward.1} parent=1 // pred_region
      _
    $region5: #{model_forward.1} parent=1 // pred_fallthru
      _
    // Predicated region
    $region6: #{model_forward.1} parent=1 // pred_check
      _
    $region7: #{model_forward.1} parent=1 // pred_check_branch
      %21 = sbr.rel (0) target = $region9
    $region8: #{model_forward.1} parent=1 // pred_region
      _
    $region9: #{model_forward.1} parent=1 // pred_fallthru
      _
    // Predicated region
    $region10: #{model_forward.1} parent=1 // pred_check
      _
    $region11: #{model_forward.1} parent=1 // pred_check_branch
      %23 = sbr.rel (0) target = $region13
    $region12: #{model_forward.1} parent=1 // pred_region
      _
    $region13: #{model_forward.1} parent=1 // pred_fallthru
      _
    // Predicated region
    $region14: #{model_forward.1} parent=1 // pred_check
      _
    $region15: #{model_forward.1} parent=1 // pred_check_branch
      %25 = sbr.rel (0) target = $region17
    $region16: #{model_forward.1} parent=1 // pred_region
      _
    $region17: #{model_forward.1} parent=1 // pred_fallthru
      _
    // Predicated region
    $region18: #{model_forward.1} parent=1 // pred_check
      _
    $region19: #{model_forward.1} parent=1 // pred_check_branch
      %27 = sbr.rel (0) target = $region21
    $region20: #{model_forward.1} parent=1 // pred_region
      _
    $region21: #{model_forward.1} parent=1 // pred_fallthru
      _
    // Predicated region
    $region22: #{model_forward.1} parent=1 // pred_check
      _
    $region23: #{model_forward.1} parent=1 // pred_check_branch
      %29 = sbr.rel (0) target = $region25
    $region24: #{model_forward.1} parent=1 // pred_region
      _
    $region25: #{model_forward.1} parent=1 // pred_fallthru
      _
    // Predicated region
    $region26: #{model_forward.1} parent=1 // pred_check
      _
    $region27: #{model_forward.1} parent=1 // pred_check_branch
      %31 = sbr.rel (0) target = $region29
    $region28: #{model_forward.1} parent=1 // pred_region
      _
    $region29: #{model_forward.1} parent=1 // pred_fallthru
      _
    // Predicated region
    $region30: #{model_forward.1} parent=1 // pred_check
      _
    $region31: #{model_forward.1} parent=1 // pred_check_branch
      %33 = sbr.rel (0) target = $region33
    $region32: #{model_forward.1} parent=1 // pred_region
      _
    $region33: #{model_forward.1} parent=1 // pred_fallthru
      _
    // Predicated region
    $region34: #{model_forward.1} parent=1 // pred_check
      _
    $region35: #{model_forward.1} parent=1 // pred_check_branch
      %35 = sbr.rel (0) target = $region37
    $region36: #{model_forward.1} parent=1 // pred_region
      _
    $region37: #{model_forward.1} parent=1 // pred_fallthru
      _
    %v36 = vld [vmem:[%s3] sm:$0xff]
    %v37 = vld [vmem:[%s3 + $0x8] sm:$0xff]
    %v38 = vld [vmem:[%s3 + $0x10] sm:$0xff]
    %v39 = vld [vmem:[%s3 + $0x18] sm:$0xff]
    %v40 = vld [vmem:[%s4] sm:$0xff]
    %v41 = vld [vmem:[%s4 + $0x8] sm:$0xff]
    %v42 = vld [vmem:[%s4 + $0x10] sm:$0xff]
    %v43 = vld [vmem:[%s4 + $0x18] sm:$0xff]
    %v44 = vld [vmem:[%s7] sm:$0xff]
    %v45 = vld [vmem:[%s7 + $0x8] sm:$0xff]
    %v46 = vld [vmem:[%s7 + $0x10] sm:$0xff]
    %v47 = vld [vmem:[%s7 + $0x18] sm:$0xff]
    %v48 = vld [vmem:[%s7 + $0x20] sm:$0xff]
    %v49 = vld [vmem:[%s7 + $0x28] sm:$0xff]
    %v50 = vld [vmem:[%s7 + $0x30] sm:$0xff]
    %v51 = vld [vmem:[%s7 + $0x38] sm:$0xff]
    %v52 = vld [vmem:[%s7 + $0x40] sm:$0xff]
    %v53 = vld [vmem:[%s7 + $0x48] sm:$0xff]
    %v54 = vld [vmem:[%s7 + $0x50] sm:$0xff]
    %v55 = vld [vmem:[%s7 + $0x58] sm:$0xff]
    %v56 = vld [vmem:[%s7 + $0x60] sm:$0xff]
    %v57 = vld [vmem:[%s7 + $0x68] sm:$0xff]
    %v58 = vld [vmem:[%s7 + $0x70] sm:$0xff]
    %v59 = vld [vmem:[%s7 + $0x78] sm:$0xff]
    %v60 = vld [vmem:[%s7 + $0x80] sm:$0xff]
    %v61 = vld [vmem:[%s7 + $0x88] sm:$0xff]
    %v62 = vld [vmem:[%s7 + $0x90] sm:$0xff]
    %v63 = vld [vmem:[%s7 + $0x98] sm:$0xff]
    %v64 = vld [vmem:[%s7 + $0xa0] sm:$0xff]
    %v65 = vld [vmem:[%s7 + $0xa8] sm:$0xff]
    %v66 = vld [vmem:[%s7 + $0xb0] sm:$0xff]
    %v67 = vld [vmem:[%s7 + $0xb8] sm:$0xff]
    %v68 = vld [vmem:[%s7 + $0xc0] sm:$0xff]
    %v69 = vld [vmem:[%s7 + $0xc8] sm:$0xff]
    %v70 = vld [vmem:[%s7 + $0xd0] sm:$0xff]
    %v71 = vld [vmem:[%s7 + $0xd8] sm:$0xff]
    %v72 = vld [vmem:[%s7 + $0xe0] sm:$0xff]
    %v73 = vld [vmem:[%s7 + $0xe8] sm:$0xff]
    %v74 = vld [vmem:[%s7 + $0xf0] sm:$0xff]
    %v75 = vld [vmem:[%s7 + $0xf8] sm:$0xff]
    %v76 = vld [vmem:[%s7 + $0x100] sm:$0xff]
    %v77 = vld [vmem:[%s7 + $0x108] sm:$0xff]
    %v78 = vld [vmem:[%s7 + $0x110] sm:$0xff]
    %v79 = vld [vmem:[%s7 + $0x118] sm:$0xff]
    %v80 = vld [vmem:[%s7 + $0x120] sm:$0xff]
    %v81 = vld [vmem:[%s7 + $0x128] sm:$0xff]
    %v82 = vld [vmem:[%s7 + $0x130] sm:$0xff]
    %v83 = vld [vmem:[%s7 + $0x138] sm:$0xff]
    %v84 = vld [vmem:[%s7 + $0x140] sm:$0xff]
    %v85 = vld [vmem:[%s7 + $0x148] sm:$0xff]
    %v86 = vld [vmem:[%s7 + $0x150] sm:$0xff]
    %v87 = vld [vmem:[%s7 + $0x158] sm:$0xff]
    %v88 = vld [vmem:[%s7 + $0x160] sm:$0xff]
    %v89 = vld [vmem:[%s7 + $0x168] sm:$0xff]
    %v90 = vld [vmem:[%s7 + $0x170] sm:$0xff]
    %v91 = vld [vmem:[%s7 + $0x178] sm:$0xff]
    %v92 = vld [vmem:[%s7 + $0x180] sm:$0xff]
    %v93 = vld [vmem:[%s7 + $0x188] sm:$0xff]
    %v94 = vld [vmem:[%s7 + $0x190] sm:$0xff]
    %v95 = vld [vmem:[%s7 + $0x198] sm:$0xff]
    %v96 = vld [vmem:[%s7 + $0x1a0] sm:$0xff]
    %v97 = vld [vmem:[%s7 + $0x1a8] sm:$0xff]
    %v98 = vld [vmem:[%s7 + $0x1b0] sm:$0xff]
    %v99 = vld [vmem:[%s7 + $0x1b8] sm:$0xff]
    %v100 = vld [vmem:[%s7 + $0x1c0] sm:$0xff]
    %v101 = vld [vmem:[%s7 + $0x1c8] sm:$0xff]
    %v102 = vld [vmem:[%s7 + $0x1d0] sm:$0xff]
    %v103 = vld [vmem:[%s7 + $0x1d8] sm:$0xff]
    %v104 = vld [vmem:[%s7 + $0x1e0] sm:$0xff]
    %v105 = vld [vmem:[%s7 + $0x1e8] sm:$0xff]
    %v106 = vld [vmem:[%s7 + $0x1f0] sm:$0xff]
    %v107 = vld [vmem:[%s7 + $0x1f8] sm:$0xff]
    %v108 = vld [vmem:[%s7 + $0x200] sm:$0xff]
    %v109 = vld [vmem:[%s7 + $0x208] sm:$0xff]
    %v110 = vld [vmem:[%s7 + $0x210] sm:$0xff]
    %v111 = vld [vmem:[%s7 + $0x218] sm:$0xff]
    %v112 = vld [vmem:[%s7 + $0x220] sm:$0xff]
    %v113 = vld [vmem:[%s7 + $0x228] sm:$0xff]
    %v114 = vld [vmem:[%s7 + $0x230] sm:$0xff]
    %v115 = vld [vmem:[%s7 + $0x238] sm:$0xff]
    %v116 = vld [vmem:[%s7 + $0x240] sm:$0xff]
    %v117 = vld [vmem:[%s7 + $0x248] sm:$0xff]
    %v118 = vld [vmem:[%s7 + $0x250] sm:$0xff]
    %v119 = vld [vmem:[%s7 + $0x258] sm:$0xff]
    %v120 = vld [vmem:[%s7 + $0x260] sm:$0xff]
    %v121 = vld [vmem:[%s7 + $0x268] sm:$0xff]
    %v122 = vld [vmem:[%s7 + $0x270] sm:$0xff]
    %v123 = vld [vmem:[%s7 + $0x278] sm:$0xff]
    %v124 = vld [vmem:[%s7 + $0x280] sm:$0xff]
    %v125 = vld [vmem:[%s7 + $0x288] sm:$0xff]
    %v126 = vld [vmem:[%s7 + $0x290] sm:$0xff]
    %v127 = vld [vmem:[%s7 + $0x298] sm:$0xff]
    %v128 = vld [vmem:[%s7 + $0x2a0] sm:$0xff]
    %v129 = vld [vmem:[%s7 + $0x2a8] sm:$0xff]
    %v130 = vld [vmem:[%s7 + $0x2b0] sm:$0xff]
    %v131 = vld [vmem:[%s7 + $0x2b8] sm:$0xff]
    %v132 = vld [vmem:[%s7 + $0x2c0] sm:$0xff]
    %v133 = vld [vmem:[%s7 + $0x2c8] sm:$0xff]
    %v134 = vld [vmem:[%s7 + $0x2d0] sm:$0xff]
    %v135 = vld [vmem:[%s7 + $0x2d8] sm:$0xff]
    %v136 = vld [vmem:[%s7 + $0x2e0] sm:$0xff]
    %v137 = vld [vmem:[%s7 + $0x2e8] sm:$0xff]
    %v138 = vld [vmem:[%s7 + $0x2f0] sm:$0xff]
    %v139 = vld [vmem:[%s7 + $0x2f8] sm:$0xff]
    %v140 = vld [vmem:[%s7 + $0x300] sm:$0xff]
    %v141 = vld [vmem:[%s7 + $0x308] sm:$0xff]
    %v142 = vld [vmem:[%s7 + $0x310] sm:$0xff]
    %v143 = vld [vmem:[%s7 + $0x318] sm:$0xff]
    %v144 = vld [vmem:[%s7 + $0x320] sm:$0xff]
    %v145 = vld [vmem:[%s7 + $0x328] sm:$0xff]
    %v146 = vld [vmem:[%s7 + $0x330] sm:$0xff]
    %v147 = vld [vmem:[%s7 + $0x338] sm:$0xff]
    %v148 = vld [vmem:[%s7 + $0x340] sm:$0xff]
    %v149 = vld [vmem:[%s7 + $0x348] sm:$0xff]
    %v150 = vld [vmem:[%s7 + $0x350] sm:$0xff]
    %v151 = vld [vmem:[%s7 + $0x358] sm:$0xff]
    %v152 = vld [vmem:[%s7 + $0x360] sm:$0xff]
    %v153 = vld [vmem:[%s7 + $0x368] sm:$0xff]
    %v154 = vld [vmem:[%s7 + $0x370] sm:$0xff]
    %v155 = vld [vmem:[%s7 + $0x378] sm:$0xff]
    %v156 = vld [vmem:[%s7 + $0x380] sm:$0xff]
    %v157 = vld [vmem:[%s7 + $0x388] sm:$0xff]
    %v158 = vld [vmem:[%s7 + $0x390] sm:$0xff]
    %v159 = vld [vmem:[%s7 + $0x398] sm:$0xff]
    %v160 = vld [vmem:[%s7 + $0x3a0] sm:$0xff]
    %v161 = vld [vmem:[%s7 + $0x3a8] sm:$0xff]
    %v162 = vld [vmem:[%s7 + $0x3b0] sm:$0xff]
    %v163 = vld [vmem:[%s7 + $0x3b8] sm:$0xff]
    %v164 = vld [vmem:[%s7 + $0x3c0] sm:$0xff]
    %v165 = vld [vmem:[%s7 + $0x3c8] sm:$0xff]
    %v166 = vld [vmem:[%s7 + $0x3d0] sm:$0xff]
    %v167 = vld [vmem:[%s7 + $0x3d8] sm:$0xff]
    %v168 = vld [vmem:[%s7 + $0x3e0] sm:$0xff]
    %v169 = vld [vmem:[%s7 + $0x3e8] sm:$0xff]
    %v170 = vld [vmem:[%s7 + $0x3f0] sm:$0xff]
    %v171 = vld [vmem:[%s7 + $0x3f8] sm:$0xff]
    %v172 = vld [vmem:[%s7 + $0x400] sm:$0xff]
    %v173 = vld [vmem:[%s7 + $0x408] sm:$0xff]
    %v174 = vld [vmem:[%s7 + $0x410] sm:$0xff]
    %v175 = vld [vmem:[%s7 + $0x418] sm:$0xff]
    %v176 = vld [vmem:[%s7 + $0x420] sm:$0xff]
    %v177 = vld [vmem:[%s7 + $0x428] sm:$0xff]
    %v178 = vld [vmem:[%s7 + $0x430] sm:$0xff]
    %v179 = vld [vmem:[%s7 + $0x438] sm:$0xff]
    %v180 = vld [vmem:[%s7 + $0x440] sm:$0xff]
    %v181 = vld [vmem:[%s7 + $0x448] sm:$0xff]
    %v182 = vld [vmem:[%s7 + $0x450] sm:$0xff]
    %v183 = vld [vmem:[%s7 + $0x458] sm:$0xff]
    %v184 = vld [vmem:[%s7 + $0x460] sm:$0xff]
    %v185 = vld [vmem:[%s7 + $0x468] sm:$0xff]
    %v186 = vld [vmem:[%s7 + $0x470] sm:$0xff]
    %v187 = vld [vmem:[%s7 + $0x478] sm:$0xff]
    %v188 = vld [vmem:[%s7 + $0x480] sm:$0xff]
    %v189 = vld [vmem:[%s7 + $0x488] sm:$0xff]
    %v190 = vld [vmem:[%s7 + $0x490] sm:$0xff]
    %v191 = vld [vmem:[%s7 + $0x498] sm:$0xff]
    %v192 = vld [vmem:[%s7 + $0x4a0] sm:$0xff]
    %v193 = vld [vmem:[%s7 + $0x4a8] sm:$0xff]
    %v194 = vld [vmem:[%s7 + $0x4b0] sm:$0xff]
    %v195 = vld [vmem:[%s7 + $0x4b8] sm:$0xff]
    %v196 = vld [vmem:[%s7 + $0x4c0] sm:$0xff]
    %v197 = vld [vmem:[%s7 + $0x4c8] sm:$0xff]
    %v198 = vld [vmem:[%s7 + $0x4d0] sm:$0xff]
    %v199 = vld [vmem:[%s7 + $0x4d8] sm:$0xff]
    %v200 = vld [vmem:[%s7 + $0x4e0] sm:$0xff]
    %v201 = vld [vmem:[%s7 + $0x4e8] sm:$0xff]
    %v202 = vld [vmem:[%s7 + $0x4f0] sm:$0xff]
    %v203 = vld [vmem:[%s7 + $0x4f8] sm:$0xff]
    %v204 = vld [vmem:[%s7 + $0x500] sm:$0xff]
    %v205 = vld [vmem:[%s7 + $0x508] sm:$0xff]
    %v206 = vld [vmem:[%s7 + $0x510] sm:$0xff]
    %v207 = vld [vmem:[%s7 + $0x518] sm:$0xff]
    %v208 = vld [vmem:[%s7 + $0x520] sm:$0xff]
    %v209 = vld [vmem:[%s7 + $0x528] sm:$0xff]
    %v210 = vld [vmem:[%s7 + $0x530] sm:$0xff]
    %v211 = vld [vmem:[%s7 + $0x538] sm:$0xff]
    %v212 = vld [vmem:[%s7 + $0x540] sm:$0xff]
    %v213 = vld [vmem:[%s7 + $0x548] sm:$0xff]
    %v214 = vld [vmem:[%s7 + $0x550] sm:$0xff]
    %v215 = vld [vmem:[%s7 + $0x558] sm:$0xff]
    %v216 = vld [vmem:[%s7 + $0x560] sm:$0xff]
    %v217 = vld [vmem:[%s7 + $0x568] sm:$0xff]
    %v218 = vld [vmem:[%s7 + $0x570] sm:$0xff]
    %v219 = vld [vmem:[%s7 + $0x578] sm:$0xff]
    %v220 = vld [vmem:[%s7 + $0x580] sm:$0xff]
    %v221 = vld [vmem:[%s7 + $0x588] sm:$0xff]
    %v222 = vld [vmem:[%s7 + $0x590] sm:$0xff]
    %v223 = vld [vmem:[%s7 + $0x598] sm:$0xff]
    %v224 = vld [vmem:[%s7 + $0x5a0] sm:$0xff]
    %v225 = vld [vmem:[%s7 + $0x5a8] sm:$0xff]
    %v226 = vld [vmem:[%s7 + $0x5b0] sm:$0xff]
    %v227 = vld [vmem:[%s7 + $0x5b8] sm:$0xff]
    %v228 = vld [vmem:[%s7 + $0x5c0] sm:$0xff]
    %v229 = vld [vmem:[%s7 + $0x5c8] sm:$0xff]
    %v230 = vld [vmem:[%s7 + $0x5d0] sm:$0xff]
    %v231 = vld [vmem:[%s7 + $0x5d8] sm:$0xff]
    %v232 = vld [vmem:[%s7 + $0x5e0] sm:$0xff]
    %v233 = vld [vmem:[%s7 + $0x5e8] sm:$0xff]
    %v234 = vld [vmem:[%s7 + $0x5f0] sm:$0xff]
    %v235 = vld [vmem:[%s7 + $0x5f8] sm:$0xff]
    %v236 = vld [vmem:[%s7 + $0x600] sm:$0xff]
    %v237 = vld [vmem:[%s7 + $0x608] sm:$0xff]
    %v238 = vld [vmem:[%s7 + $0x610] sm:$0xff]
    %v239 = vld [vmem:[%s7 + $0x618] sm:$0xff]
    %v240 = vld [vmem:[%s7 + $0x620] sm:$0xff]
    %v241 = vld [vmem:[%s7 + $0x628] sm:$0xff]
    %v242 = vld [vmem:[%s7 + $0x630] sm:$0xff]
    %v243 = vld [vmem:[%s7 + $0x638] sm:$0xff]
    %v244 = vld [vmem:[%s7 + $0x640] sm:$0xff]
    %v245 = vld [vmem:[%s7 + $0x648] sm:$0xff]
    %v246 = vld [vmem:[%s7 + $0x650] sm:$0xff]
    %v247 = vld [vmem:[%s7 + $0x658] sm:$0xff]
    %v248 = vld [vmem:[%s7 + $0x660] sm:$0xff]
    %v249 = vld [vmem:[%s7 + $0x668] sm:$0xff]
    %v250 = vld [vmem:[%s7 + $0x670] sm:$0xff]
    %v251 = vld [vmem:[%s7 + $0x678] sm:$0xff]
    %v252 = vld [vmem:[%s7 + $0x680] sm:$0xff]
    %v253 = vld [vmem:[%s7 + $0x688] sm:$0xff]
    %v254 = vld [vmem:[%s7 + $0x690] sm:$0xff]
    %v255 = vld [vmem:[%s7 + $0x698] sm:$0xff]
    %v256 = vld [vmem:[%s7 + $0x6a0] sm:$0xff]
    %v257 = vld [vmem:[%s7 + $0x6a8] sm:$0xff]
    %v258 = vld [vmem:[%s7 + $0x6b0] sm:$0xff]
    %v259 = vld [vmem:[%s7 + $0x6b8] sm:$0xff]
    %v260 = vld [vmem:[%s7 + $0x6c0] sm:$0xff]
    %v261 = vld [vmem:[%s7 + $0x6c8] sm:$0xff]
    %v262 = vld [vmem:[%s7 + $0x6d0] sm:$0xff]
    %v263 = vld [vmem:[%s7 + $0x6d8] sm:$0xff]
    %v264 = vld [vmem:[%s7 + $0x6e0] sm:$0xff]
    %v265 = vld [vmem:[%s7 + $0x6e8] sm:$0xff]
    %v266 = vld [vmem:[%s7 + $0x6f0] sm:$0xff]
    %v267 = vld [vmem:[%s7 + $0x6f8] sm:$0xff]
    %v268 = vld [vmem:[%s7 + $0x700] sm:$0xff]
    %v269 = vld [vmem:[%s7 + $0x708] sm:$0xff]
    %v270 = vld [vmem:[%s7 + $0x710] sm:$0xff]
    %v271 = vld [vmem:[%s7 + $0x718] sm:$0xff]
    %v272 = vld [vmem:[%s7 + $0x720] sm:$0xff]
    %v273 = vld [vmem:[%s7 + $0x728] sm:$0xff]
    %v274 = vld [vmem:[%s7 + $0x730] sm:$0xff]
    %v275 = vld [vmem:[%s7 + $0x738] sm:$0xff]
    %v276 = vld [vmem:[%s7 + $0x740] sm:$0xff]
    %v277 = vld [vmem:[%s7 + $0x748] sm:$0xff]
    %v278 = vld [vmem:[%s7 + $0x750] sm:$0xff]
    %v279 = vld [vmem:[%s7 + $0x758] sm:$0xff]
    %v280 = vld [vmem:[%s7 + $0x760] sm:$0xff]
    %v281 = vld [vmem:[%s7 + $0x768] sm:$0xff]
    %v282 = vld [vmem:[%s7 + $0x770] sm:$0xff]
    %v283 = vld [vmem:[%s7 + $0x778] sm:$0xff]
    %v284 = vld [vmem:[%s7 + $0x780] sm:$0xff]
    %v285 = vld [vmem:[%s7 + $0x788] sm:$0xff]
    %v286 = vld [vmem:[%s7 + $0x790] sm:$0xff]
    %v287 = vld [vmem:[%s7 + $0x798] sm:$0xff]
    %v288 = vld [vmem:[%s7 + $0x7a0] sm:$0xff]
    %v289 = vld [vmem:[%s7 + $0x7a8] sm:$0xff]
    %v290 = vld [vmem:[%s7 + $0x7b0] sm:$0xff]
    %v291 = vld [vmem:[%s7 + $0x7b8] sm:$0xff]
    %v292 = vld [vmem:[%s7 + $0x7c0] sm:$0xff]
    %v293 = vld [vmem:[%s7 + $0x7c8] sm:$0xff]
    %v294 = vld [vmem:[%s7 + $0x7d0] sm:$0xff]
    %v295 = vld [vmem:[%s7 + $0x7d8] sm:$0xff]
    %v296 = vld [vmem:[%s7 + $0x7e0] sm:$0xff]
    %v297 = vld [vmem:[%s7 + $0x7e8] sm:$0xff]
    %v298 = vld [vmem:[%s7 + $0x7f0] sm:$0xff]
    %v299 = vld [vmem:[%s7 + $0x7f8] sm:$0xff]
    %v300 = vld [vmem:[%s8] sm:$0xf]
    %v302 = vlaneseq
    %v303 = vshrl.u32 %v302, 7
    %v304 = vsub.s32 0, %v303
    %v305 = vrot.slane %v300, %v304
    %v306 = vlaneseq
    %v307 = vshrl.u32 %v306, 7
    %v308 = vsub.s32 1, %v307
    %v309 = vrot.slane %v300, %v308
    %v310 = vlaneseq
    %v311 = vshrl.u32 %v310, 7
    %v312 = vsub.s32 2, %v311
    %v313 = vrot.slane %v300, %v312
    %v314 = vlaneseq
    %v315 = vshrl.u32 %v314, 7
    %v316 = vsub.s32 3, %v315
    %v317 = vrot.slane %v300, %v316
    %322 = vmatprep.subr.mxu0 %v45
    %323 = vmatpush1.msra.mxu0 %v44
    %324 = vmatprep.subr.mxu0 %v49
    %325 = vmatpush1.msra.mxu0 %v48
    %326 = vmatprep.subr.mxu0 %v53
    %327 = vmatpush1.msra.mxu0 %v52
    %328 = vmatprep.subr.mxu0 %v57
    %329 = vmatpush1.msra.mxu0 %v56
    %330 = vmatprep.subr.mxu0 %v61
    %331 = vmatpush1.msra.mxu0 %v60
    %332 = vmatprep.subr.mxu0 %v65
    %333 = vmatpush1.msra.mxu0 %v64
    %334 = vmatprep.subr.mxu0 %v69
    %335 = vmatpush1.msra.mxu0 %v68
    %336 = vmatprep.subr.mxu0 %v73
    %337 = vmatpush1.msra.mxu0 %v72
    %338 = vmatprep.subr.mxu0 %v77
    %339 = vmatpush1.msra.mxu0 %v76
    %340 = vmatprep.subr.mxu0 %v81
    %341 = vmatpush1.msra.mxu0 %v80
    %342 = vmatprep.subr.mxu0 %v85
    %343 = vmatpush1.msra.mxu0 %v84
    %344 = vmatprep.subr.mxu0 %v89
    %345 = vmatpush1.msra.mxu0 %v88
    %346 = vmatprep.subr.mxu0 %v93
    %347 = vmatpush1.msra.mxu0 %v92
    %348 = vmatprep.subr.mxu0 %v97
    %349 = vmatpush1.msra.mxu0 %v96
    %350 = vmatprep.subr.mxu0 %v101
    %351 = vmatpush1.msra.mxu0 %v100
    %352 = vmatprep.subr.mxu0 %v105
    %353 = vmatpush1.msra.mxu0 %v104
    %354 = vmatprep.subr.mxu0 %v109
    %355 = vmatpush1.msra.mxu0 %v108
    %356 = vmatprep.subr.mxu0 %v113
    %357 = vmatpush1.msra.mxu0 %v112
    %358 = vmatprep.subr.mxu0 %v117
    %359 = vmatpush1.msra.mxu0 %v116
    %360 = vmatprep.subr.mxu0 %v121
    %361 = vmatpush1.msra.mxu0 %v120
    %362 = vmatprep.subr.mxu0 %v125
    %363 = vmatpush1.msra.mxu0 %v124
    %364 = vmatprep.subr.mxu0 %v129
    %365 = vmatpush1.msra.mxu0 %v128
    %366 = vmatprep.subr.mxu0 %v133
    %367 = vmatpush1.msra.mxu0 %v132
    %368 = vmatprep.subr.mxu0 %v137
    %369 = vmatpush1.msra.mxu0 %v136
    %370 = vmatprep.subr.mxu0 %v141
    %371 = vmatpush1.msra.mxu0 %v140
    %372 = vmatprep.subr.mxu0 %v145
    %373 = vmatpush1.msra.mxu0 %v144
    %374 = vmatprep.subr.mxu0 %v149
    %375 = vmatpush1.msra.mxu0 %v148
    %376 = vmatprep.subr.mxu0 %v153
    %377 = vmatpush1.msra.mxu0 %v152
    %378 = vmatprep.subr.mxu0 %v157
    %379 = vmatpush1.msra.mxu0 %v156
    %380 = vmatprep.subr.mxu0 %v161
    %381 = vmatpush1.msra.mxu0 %v160
    %382 = vmatprep.subr.mxu0 %v165
    %383 = vmatpush1.msra.mxu0 %v164
    %384 = vmatprep.subr.mxu0 %v169
    %385 = vmatpush1.msra.mxu0 %v168
    %386 = vmatprep.mubr.f32.mxu0 %v37
    %387 = vmatmul.mubr.f32.gmra.mrb[0].mxu0 %v36
    %v388 = vpop.f32.mrb[0].mxu0
    %v389 = vadd.f32 %v305, %v388
    %v390 = vpop.f32.mrb[0].mxu0
    %v391 = vadd.f32 %v309, %v390
    %392 = vmatprep.mubr.f32.mxu0 %v41
    %393 = vmatmul.mubr.f32.gmra.mrb[0].mxu0 %v40
    %v394 = vpop.f32.mrb[0].mxu0
    %v395 = vpop.f32.mrb[0].mxu0
    %396 = vdwg.mxu0
    %397 = vmatprep.subr.mxu0 %v173
    %398 = vmatpush1.msra.mxu0 %v172
    %399 = vmatprep.subr.mxu0 %v177
    %400 = vmatpush1.msra.mxu0 %v176
    %401 = vmatprep.subr.mxu0 %v181
    %402 = vmatpush1.msra.mxu0 %v180
    %403 = vmatprep.subr.mxu0 %v185
    %404 = vmatpush1.msra.mxu0 %v184
    %405 = vmatprep.subr.mxu0 %v189
    %406 = vmatpush1.msra.mxu0 %v188
    %407 = vmatprep.subr.mxu0 %v193
    %408 = vmatpush1.msra.mxu0 %v192
    %409 = vmatprep.subr.mxu0 %v197
    %410 = vmatpush1.msra.mxu0 %v196
    %411 = vmatprep.subr.mxu0 %v201
    %412 = vmatpush1.msra.mxu0 %v200
    %413 = vmatprep.subr.mxu0 %v205
    %414 = vmatpush1.msra.mxu0 %v204
    %415 = vmatprep.subr.mxu0 %v209
    %416 = vmatpush1.msra.mxu0 %v208
    %417 = vmatprep.subr.mxu0 %v213
    %418 = vmatpush1.msra.mxu0 %v212
    %419 = vmatprep.subr.mxu0 %v217
    %420 = vmatpush1.msra.mxu0 %v216
    %421 = vmatprep.subr.mxu0 %v221
    %422 = vmatpush1.msra.mxu0 %v220
    %423 = vmatprep.subr.mxu0 %v225
    %424 = vmatpush1.msra.mxu0 %v224
    %425 = vmatprep.subr.mxu0 %v229
    %426 = vmatpush1.msra.mxu0 %v228
    %427 = vmatprep.subr.mxu0 %v233
    %428 = vmatpush1.msra.mxu0 %v232
    %429 = vmatprep.subr.mxu0 %v237
    %430 = vmatpush1.msra.mxu0 %v236
    %431 = vmatprep.subr.mxu0 %v241
    %432 = vmatpush1.msra.mxu0 %v240
    %433 = vmatprep.subr.mxu0 %v245
    %434 = vmatpush1.msra.mxu0 %v244
    %435 = vmatprep.subr.mxu0 %v249
    %436 = vmatpush1.msra.mxu0 %v248
    %437 = vmatprep.subr.mxu0 %v253
    %438 = vmatpush1.msra.mxu0 %v252
    %439 = vmatprep.subr.mxu0 %v257
    %440 = vmatpush1.msra.mxu0 %v256
    %441 = vmatprep.subr.mxu0 %v261
    %442 = vmatpush1.msra.mxu0 %v260
    %443 = vmatprep.subr.mxu0 %v265
    %444 = vmatpush1.msra.mxu0 %v264
    %445 = vmatprep.subr.mxu0 %v269
    %446 = vmatpush1.msra.mxu0 %v268
    %447 = vmatprep.subr.mxu0 %v273
    %448 = vmatpush1.msra.mxu0 %v272
    %449 = vmatprep.subr.mxu0 %v277
    %450 = vmatpush1.msra.mxu0 %v276
    %451 = vmatprep.subr.mxu0 %v281
    %452 = vmatpush1.msra.mxu0 %v280
    %453 = vmatprep.subr.mxu0 %v285
    %454 = vmatpush1.msra.mxu0 %v284
    %455 = vmatprep.subr.mxu0 %v289
    %456 = vmatpush1.msra.mxu0 %v288
    %457 = vmatprep.subr.mxu0 %v293
    %458 = vmatpush1.msra.mxu0 %v292
    %459 = vmatprep.subr.mxu0 %v297
    %460 = vmatpush1.msra.mxu0 %v296
    %461 = vmatprep.mubr.f32.mxu0 %v39
    %462 = vmatmul.mubr.f32.gmra.mrb[0].mxu0 %v38
    %v463 = vpop.f32.mrb[0].mxu0
    %v464 = vadd.f32 %v389, %v463
    %v465 = vpop.f32.mrb[0].mxu0
    %v466 = vadd.f32 %v391, %v465
    %467 = vmatprep.mubr.f32.mxu0 %v43
    %468 = vmatmul.mubr.f32.gmra.mrb[0].mxu0 %v42
    %v469 = vpop.f32.mrb[0].mxu0
    %v470 = vpop.f32.mrb[0].mxu0
    %471 = vdwg.mxu0
    %472 = vmatprep.subr.mxu0 %v47
    %473 = vmatpush1.msra.mxu0 %v46
    %474 = vmatprep.subr.mxu0 %v51
    %475 = vmatpush1.msra.mxu0 %v50
    %476 = vmatprep.subr.mxu0 %v55
    %477 = vmatpush1.msra.mxu0 %v54
    %478 = vmatprep.subr.mxu0 %v59
    %479 = vmatpush1.msra.mxu0 %v58
    %480 = vmatprep.subr.mxu0 %v63
    %481 = vmatpush1.msra.mxu0 %v62
    %482 = vmatprep.subr.mxu0 %v67
    %483 = vmatpush1.msra.mxu0 %v66
    %484 = vmatprep.subr.mxu0 %v71
    %485 = vmatpush1.msra.mxu0 %v70
    %486 = vmatprep.subr.mxu0 %v75
    %487 = vmatpush1.msra.mxu0 %v74
    %488 = vmatprep.subr.mxu0 %v79
    %489 = vmatpush1.msra.mxu0 %v78
    %490 = vmatprep.subr.mxu0 %v83
    %491 = vmatpush1.msra.mxu0 %v82
    %492 = vmatprep.subr.mxu0 %v87
    %493 = vmatpush1.msra.mxu0 %v86
    %494 = vmatprep.subr.mxu0 %v91
    %495 = vmatpush1.msra.mxu0 %v90
    %496 = vmatprep.subr.mxu0 %v95
    %497 = vmatpush1.msra.mxu0 %v94
    %498 = vmatprep.subr.mxu0 %v99
    %499 = vmatpush1.msra.mxu0 %v98
    %500 = vmatprep.subr.mxu0 %v103
    %501 = vmatpush1.msra.mxu0 %v102
    %502 = vmatprep.subr.mxu0 %v107
    %503 = vmatpush1.msra.mxu0 %v106
    %504 = vmatprep.subr.mxu0 %v111
    %505 = vmatpush1.msra.mxu0 %v110
    %506 = vmatprep.subr.mxu0 %v115
    %507 = vmatpush1.msra.mxu0 %v114
    %508 = vmatprep.subr.mxu0 %v119
    %509 = vmatpush1.msra.mxu0 %v118
    %510 = vmatprep.subr.mxu0 %v123
    %511 = vmatpush1.msra.mxu0 %v122
    %512 = vmatprep.subr.mxu0 %v127
    %513 = vmatpush1.msra.mxu0 %v126
    %514 = vmatprep.subr.mxu0 %v131
    %515 = vmatpush1.msra.mxu0 %v130
    %516 = vmatprep.subr.mxu0 %v135
    %517 = vmatpush1.msra.mxu0 %v134
    %518 = vmatprep.subr.mxu0 %v139
    %519 = vmatpush1.msra.mxu0 %v138
    %520 = vmatprep.subr.mxu0 %v143
    %521 = vmatpush1.msra.mxu0 %v142
    %522 = vmatprep.subr.mxu0 %v147
    %523 = vmatpush1.msra.mxu0 %v146
    %524 = vmatprep.subr.mxu0 %v151
    %525 = vmatpush1.msra.mxu0 %v150
    %526 = vmatprep.subr.mxu0 %v155
    %527 = vmatpush1.msra.mxu0 %v154
    %528 = vmatprep.subr.mxu0 %v159
    %529 = vmatpush1.msra.mxu0 %v158
    %530 = vmatprep.subr.mxu0 %v163
    %531 = vmatpush1.msra.mxu0 %v162
    %532 = vmatprep.subr.mxu0 %v167
    %533 = vmatpush1.msra.mxu0 %v166
    %534 = vmatprep.subr.mxu0 %v171
    %535 = vmatpush1.msra.mxu0 %v170
    %536 = vmatprep.mubr.f32.mxu0 %v37
    %537 = vmatmul.mubr.f32.gmra.mrb[0].mxu0 %v36
    %v538 = vpop.f32.mrb[0].mxu0
    %v539 = vpop.f32.mrb[0].mxu0
    %540 = vmatprep.mubr.f32.mxu0 %v41
    %541 = vmatmul.mubr.f32.gmra.mrb[0].mxu0 %v40
    %v542 = vpop.f32.mrb[0].mxu0
    %v543 = vadd.f32 %v313, %v542
    %v544 = vpop.f32.mrb[0].mxu0
    %v545 = vadd.f32 %v317, %v544
    %546 = vdwg.mxu0
    %547 = vmatprep.subr.mxu0 %v175
    %548 = vmatpush1.msra.mxu0 %v174
    %549 = vmatprep.subr.mxu0 %v179
    %550 = vmatpush1.msra.mxu0 %v178
    %551 = vmatprep.subr.mxu0 %v183
    %552 = vmatpush1.msra.mxu0 %v182
    %553 = vmatprep.subr.mxu0 %v187
    %554 = vmatpush1.msra.mxu0 %v186
    %555 = vmatprep.subr.mxu0 %v191
    %556 = vmatpush1.msra.mxu0 %v190
    %557 = vmatprep.subr.mxu0 %v195
    %558 = vmatpush1.msra.mxu0 %v194
    %559 = vmatprep.subr.mxu0 %v199
    %560 = vmatpush1.msra.mxu0 %v198
    %561 = vmatprep.subr.mxu0 %v203
    %562 = vmatpush1.msra.mxu0 %v202
    %563 = vmatprep.subr.mxu0 %v207
    %564 = vmatpush1.msra.mxu0 %v206
    %565 = vmatprep.subr.mxu0 %v211
    %566 = vmatpush1.msra.mxu0 %v210
    %567 = vmatprep.subr.mxu0 %v215
    %568 = vmatpush1.msra.mxu0 %v214
    %569 = vmatprep.subr.mxu0 %v219
    %570 = vmatpush1.msra.mxu0 %v218
    %571 = vmatprep.subr.mxu0 %v223
    %572 = vmatpush1.msra.mxu0 %v222
    %573 = vmatprep.subr.mxu0 %v227
    %574 = vmatpush1.msra.mxu0 %v226
    %575 = vmatprep.subr.mxu0 %v231
    %576 = vmatpush1.msra.mxu0 %v230
    %577 = vmatprep.subr.mxu0 %v235
    %578 = vmatpush1.msra.mxu0 %v234
    %579 = vmatprep.subr.mxu0 %v239
    %580 = vmatpush1.msra.mxu0 %v238
    %581 = vmatprep.subr.mxu0 %v243
    %582 = vmatpush1.msra.mxu0 %v242
    %583 = vmatprep.subr.mxu0 %v247
    %584 = vmatpush1.msra.mxu0 %v246
    %585 = vmatprep.subr.mxu0 %v251
    %586 = vmatpush1.msra.mxu0 %v250
    %587 = vmatprep.subr.mxu0 %v255
    %588 = vmatpush1.msra.mxu0 %v254
    %589 = vmatprep.subr.mxu0 %v259
    %590 = vmatpush1.msra.mxu0 %v258
    %591 = vmatprep.subr.mxu0 %v263
    %592 = vmatpush1.msra.mxu0 %v262
    %593 = vmatprep.subr.mxu0 %v267
    %594 = vmatpush1.msra.mxu0 %v266
    %595 = vmatprep.subr.mxu0 %v271
    %596 = vmatpush1.msra.mxu0 %v270
    %597 = vmatprep.subr.mxu0 %v275
    %598 = vmatpush1.msra.mxu0 %v274
    %599 = vmatprep.subr.mxu0 %v279
    %600 = vmatpush1.msra.mxu0 %v278
    %601 = vmatprep.subr.mxu0 %v283
    %602 = vmatpush1.msra.mxu0 %v282
    %603 = vmatprep.subr.mxu0 %v287
    %604 = vmatpush1.msra.mxu0 %v286
    %605 = vmatprep.subr.mxu0 %v291
    %606 = vmatpush1.msra.mxu0 %v290
    %607 = vmatprep.subr.mxu0 %v295
    %608 = vmatpush1.msra.mxu0 %v294
    %609 = vmatprep.subr.mxu0 %v299
    %610 = vmatpush1.msra.mxu0 %v298
    %611 = vmatprep.mubr.f32.mxu0 %v39
    %612 = vmatmul.mubr.f32.gmra.mrb[0].mxu0 %v38
    %v613 = vpop.f32.mrb[0].mxu0
    %v614 = vpop.f32.mrb[0].mxu0
    %615 = vmatprep.mubr.f32.mxu0 %v43
    %616 = vmatmul.mubr.f32.gmra.mrb[0].mxu0 %v42
    %v617 = vpop.f32.mrb[0].mxu0
    %v618 = vadd.f32 %v543, %v617
    %v619 = vpop.f32.mrb[0].mxu0
    %v620 = vadd.f32 %v545, %v619
    %621 = vdwg.mxu0
    %622 = vmatprep.subr.mxu0 %v620
    %623 = vmatpush1.xpose.msra.mxu0 %v618
    %624 = vmatprep.subr.mxu0 0.0
    %625 = vmatpush1.xpose.msra.mxu0 0.0
    %626 = vmatprep.subr.mxu0 0.0
    %627 = vmatpush1.xpose.msra.mxu0 0.0
    %628 = vmatprep.subr.mxu0 0.0
    %629 = vmatpush1.xpose.msra.mxu0 0.0
    %630 = vmatprep.subr.mxu0 0.0
    %631 = vmatpush1.xpose.msra.mxu0 0.0
    %632 = vmatprep.subr.mxu0 0.0
    %633 = vmatpush1.xpose.msra.mxu0 0.0
    %634 = vmatprep.subr.mxu0 0.0
    %635 = vmatpush1.xpose.msra.mxu0 0.0
    %636 = vmatprep.subr.mxu0 0.0
    %637 = vmatpush1.xpose.msra.mxu0 0.0
    %638 = vmatprep.subr.mxu0 0.0
    %639 = vmatpush1.xpose.msra.mxu0 0.0
    %640 = vmatprep.subr.mxu0 0.0
    %641 = vmatpush1.xpose.msra.mxu0 0.0
    %642 = vmatprep.subr.mxu0 0.0
    %643 = vmatpush1.xpose.msra.mxu0 0.0
    %644 = vmatprep.subr.mxu0 0.0
    %645 = vmatpush1.xpose.msra.mxu0 0.0
    %646 = vmatprep.subr.mxu0 0.0
    %647 = vmatpush1.xpose.msra.mxu0 0.0
    %648 = vmatprep.subr.mxu0 0.0
    %649 = vmatpush1.xpose.msra.mxu0 0.0
    %650 = vmatprep.subr.mxu0 0.0
    %651 = vmatpush1.xpose.msra.mxu0 0.0
    %652 = vmatprep.subr.mxu0 0.0
    %653 = vmatpush1.xpose.msra.mxu0 0.0
    %654 = vmatprep.subr.mxu0 0.0
    %655 = vmatpush1.xpose.msra.mxu0 0.0
    %656 = vmatprep.subr.mxu0 0.0
    %657 = vmatpush1.xpose.msra.mxu0 0.0
    %658 = vmatprep.subr.mxu0 0.0
    %659 = vmatpush1.xpose.msra.mxu0 0.0
    %660 = vmatprep.subr.mxu0 0.0
    %661 = vmatpush1.xpose.msra.mxu0 0.0
    %662 = vmatprep.subr.mxu0 0.0
    %663 = vmatpush1.xpose.msra.mxu0 0.0
    %664 = vmatprep.subr.mxu0 0.0
    %665 = vmatpush1.xpose.msra.mxu0 0.0
    %666 = vmatprep.subr.mxu0 0.0
    %667 = vmatpush1.xpose.msra.mxu0 0.0
    %668 = vmatprep.subr.mxu0 0.0
    %669 = vmatpush1.xpose.msra.mxu0 0.0
    %670 = vmatprep.subr.mxu0 0.0
    %671 = vmatpush1.xpose.msra.mxu0 0.0
    %672 = vmatprep.subr.mxu0 0.0
    %673 = vmatpush1.xpose.msra.mxu0 0.0
    %674 = vmatprep.subr.mxu0 0.0
    %675 = vmatpush1.xpose.msra.mxu0 0.0
    %676 = vmatprep.subr.mxu0 0.0
    %677 = vmatpush1.xpose.msra.mxu0 0.0
    %678 = vmatprep.subr.mxu0 0.0
    %679 = vmatpush1.xpose.msra.mxu0 0.0
    %680 = vmatprep.subr.mxu0 0.0
    %681 = vmatpush1.xpose.msra.mxu0 0.0
    %682 = vmatprep.subr.mxu0 0.0
    %683 = vmatpush1.xpose.msra.mxu0 0.0
    %684 = vmatprep.subr.mxu0 0.0
    %685 = vmatpush1.xpose.msra.mxu0 0.0
    %686 = vmatprep.mubr.f32.mxu0 %v466
    %687 = vmatmul.mubr.f32.gmra.mrb[0].mxu0 %v464
    %v688 = vpop.f32.mrb[0].mxu0
    %v689 = vadd.f32 0.0, %v688
    %v690 = vpop.f32.mrb[0].mxu0
    %691 = vdwg.mxu0
    %s692 = sld [smem:[#allocation2]]
    %v693 = vstv %s692
    %v694 = vmul.f32 %v689, %v693
    %vm695 = vcmask 64512
    %v696 = vsel %vm695, %v694, -inf
    %697 = vmax.xlane.f32.xlu0 %v696
    %v698 = vpop.xlane.xlu0 %697
    %v699 = vsub.f32 %v694, %v698
    %v700 = vmul.f32 %v699, 1.442695
    %v701 = vpow.pop %v700
    %v702 = vsel %vm695, %v701, 0.0
    %703 = vadd.xlane.f32.xlu0 %v702
    %v704 = vpop.xlane.xlu0 %703
    %v705 = vrcp.pop %v704
    %v706 = vmul.f32 %v701, %v705
    %v707 = vld [vmem:[%s6] sm:$0xff]
    %s708 = sld [smem:[#allocation3]]
    %v709 = vstv %s708
    %vm710 = vcmp.ge.u32.totalorder %v707, %v709
    %s711 = sld [smem:[#allocation4]]
    %v712 = vstv %s711
    %v713 = vmul.f32 %v706, %v712
    %v714 = vsel %vm710, %v713, 0.0
    %v715 = vld [vmem:[%s5] sm:$0xff]
    %v716 = vld [vmem:[%s5 + $0x8] sm:$0xff]
    %v718 = vsel %vm695, %v714, 0
    %720 = vmatprep.subr.mxu0 %v716
    %721 = vmatpush1.msra.mxu0 %v715
    %722 = vmatprep.subr.mxu0 0.0
    %723 = vmatpush1.msra.mxu0 0.0
    %724 = vmatprep.subr.mxu0 0.0
    %725 = vmatpush1.msra.mxu0 0.0
    %726 = vmatprep.subr.mxu0 0.0
    %727 = vmatpush1.msra.mxu0 0.0
    %728 = vmatprep.subr.mxu0 0.0
    %729 = vmatpush1.msra.mxu0 0.0
    %730 = vmatprep.subr.mxu0 0.0
    %731 = vmatpush1.msra.mxu0 0.0
    %732 = vmatprep.subr.mxu0 0.0
    %733 = vmatpush1.msra.mxu0 0.0
    %734 = vmatprep.subr.mxu0 0.0
    %735 = vmatpush1.msra.mxu0 0.0
    %736 = vmatprep.subr.mxu0 0.0
    %737 = vmatpush1.msra.mxu0 0.0
    %738 = vmatprep.subr.mxu0 0.0
    %739 = vmatpush1.msra.mxu0 0.0
    %740 = vmatprep.subr.mxu0 0.0
    %741 = vmatpush1.msra.mxu0 0.0
    %742 = vmatprep.subr.mxu0 0.0
    %743 = vmatpush1.msra.mxu0 0.0
    %744 = vmatprep.subr.mxu0 0.0
    %745 = vmatpush1.msra.mxu0 0.0
    %746 = vmatprep.subr.mxu0 0.0
    %747 = vmatpush1.msra.mxu0 0.0
    %748 = vmatprep.subr.mxu0 0.0
    %749 = vmatpush1.msra.mxu0 0.0
    %750 = vmatprep.subr.mxu0 0.0
    %751 = vmatpush1.msra.mxu0 0.0
    %752 = vmatprep.subr.mxu0 0.0
    %753 = vmatpush1.msra.mxu0 0.0
    %754 = vmatprep.subr.mxu0 0.0
    %755 = vmatpush1.msra.mxu0 0.0
    %756 = vmatprep.subr.mxu0 0.0
    %757 = vmatpush1.msra.mxu0 0.0
    %758 = vmatprep.subr.mxu0 0.0
    %759 = vmatpush1.msra.mxu0 0.0
    %760 = vmatprep.subr.mxu0 0.0
    %761 = vmatpush1.msra.mxu0 0.0
    %762 = vmatprep.subr.mxu0 0.0
    %763 = vmatpush1.msra.mxu0 0.0
    %764 = vmatprep.subr.mxu0 0.0
    %765 = vmatpush1.msra.mxu0 0.0
    %766 = vmatprep.subr.mxu0 0.0
    %767 = vmatpush1.msra.mxu0 0.0
    %768 = vmatprep.subr.mxu0 0.0
    %769 = vmatpush1.msra.mxu0 0.0
    %770 = vmatprep.subr.mxu0 0.0
    %771 = vmatpush1.msra.mxu0 0.0
    %772 = vmatprep.subr.mxu0 0.0
    %773 = vmatpush1.msra.mxu0 0.0
    %774 = vmatprep.subr.mxu0 0.0
    %775 = vmatpush1.msra.mxu0 0.0
    %776 = vmatprep.subr.mxu0 0.0
    %777 = vmatpush1.msra.mxu0 0.0
    %778 = vmatprep.subr.mxu0 0.0
    %779 = vmatpush1.msra.mxu0 0.0
    %780 = vmatprep.subr.mxu0 0.0
    %781 = vmatpush1.msra.mxu0 0.0
    %782 = vmatprep.subr.mxu0 0.0
    %783 = vmatpush1.msra.mxu0 0.0
    %784 = vmatprep.mubr.f32.mxu0 0.0
    %785 = vmatmul.mubr.f32.gmra.mrb[0].mxu0 %v718
    %v786 = vpop.f32.mrb[0].mxu0
    %v787 = vadd.f32 0.0, %v786
    %v788 = vpop.f32.mrb[0].mxu0
    %v789 = vadd.f32 0.0, %v788
    %790 = vdwg.mxu0
    %791 = vst [vmem:[#allocation5] sm:$0xff] %v787
    %792 = vst [vmem:[#allocation5 + $0x8] sm:$0xff] %v789
    // Predicated region
    $region38: #{model_forward.1} parent=1 // pred_check
      _
    $region39: #{model_forward.1} parent=1 // pred_check_branch
      %794 = sbr.rel (0) target = $region41
    $region40: #{model_forward.1} parent=1 // pred_region
      %s796 = ssub.s32 256, 256
      %797 = vsyncadd [#allocation6], %s796
      %s799 = sshll.u32 [#allocation5], 4
      %s800 = int_to_ptr.vmem [resolvable:$true] %s799
      %802 = dma.vmem_to_hbm [thread:$0]  %s800, 256, %s9, [#allocation6]
    $region41: #{model_forward.1} parent=1 // pred_fallthru
      _
    // Predicated region
    $region42: #{model_forward.1} parent=1 // pred_check
      _
    $region43: #{model_forward.1} parent=1 // pred_check_branch
      %804 = sbr.rel (0) target = $region45
    $region44: #{model_forward.1} parent=1 // pred_region
      %805 = dma.done [#allocation6], 256
    $region45: #{model_forward.1} parent=1 // pred_fallthru
      _
    %806 = vsyncpa [#allocation6], 1

</llo_original>
